<compile_context>
chip_gen: v7x
topology: tpu7x:2x2x1
jax: 0.10.0
libtpu: 0.0.40
codegen_flags: <defaults>
</compile_context>

<pallas_src>
import jax
import jax.numpy as jnp
from jax.experimental import pallas as pl
from jax.experimental.pallas import tpu as pltpu


def _awl_kernel(x_ref, out_ref):
    # x_ref: (2, num) f32 in VMEM — row 0 = params, row 1 = losses.
    x = x_ref[...]
    p = x[0:1, :]                       # (1, num) params
    l = x[1:2, :]                       # (1, num) losses
    p2 = p * p
    # Matches the torch forward exactly: 0.5 / p^2 * loss + log(1 + p^2).
    term = (0.5 / p2) * l + jnp.log(1.0 + p2)
    out_ref[0, 0] = jnp.sum(term)       # scalar straight to SMEM


def automatic_weighted_loss(params, *losses):
    """Forward of AutomaticWeightedLoss.

    `losses` may be either individual scalar losses (torch-style `awl(l1, l2, ...)`) or a
    single pre-stacked (num,) array (preferred: avoids per-call stack of scalars).
    """
    params = jnp.asarray(params, jnp.float32).reshape(-1)
    num = params.shape[0]

    if len(losses) == 1 and jnp.ndim(losses[0]) == 1:
        loss_vec = jnp.asarray(losses[0], jnp.float32)
    else:
        assert len(losses) == num, "number of losses must match number of params"
        loss_vec = jnp.stack([jnp.asarray(l, jnp.float32).reshape(()) for l in losses])
    assert loss_vec.shape == (num,)

    # Single fused input: one DMA instead of two.
    x = jnp.stack([params, loss_vec])   # (2, num) f32

    out = pl.pallas_call(
        _awl_kernel,
        out_shape=jax.ShapeDtypeStruct((1, 1), jnp.float32),
        in_specs=[pl.BlockSpec(memory_space=pltpu.MemorySpace.VMEM)],
        out_specs=pl.BlockSpec(memory_space=pltpu.MemorySpace.SMEM),
        cost_estimate=pl.CostEstimate(
            flops=5 * num, transcendentals=num, bytes_accessed=8 * num + 4),
    )(x)
    return out[0, 0]


if __name__ == "__main__":
    NUM = 2  # AutomaticWeightedLoss(num=2)

    key = jax.random.PRNGKey(0)
    # module init: params = torch.ones(num)
    params = jnp.ones((NUM,), dtype=jnp.float32)
    # deterministic scalar task losses, passed as a single pre-stacked vector
    losses = jax.random.uniform(key, (NUM,), dtype=jnp.float32, minval=0.5, maxval=3.0)

    loss_sum = automatic_weighted_loss(params, losses)
    jax.block_until_ready(loss_sum)

    # pure-JAX reference of the torch forward
    p2 = params * params
    ref = jnp.sum(0.5 / p2 * losses + jnp.log(1.0 + p2))
    assert jnp.isfinite(loss_sum)
    assert jnp.allclose(loss_sum, ref, rtol=1e-5, atol=1e-5), (loss_sum, ref)
    print("KERNEL_OK")
</pallas_src>

<mosaic_0001>
module attributes {stable_mosaic.version = 11 : i64} {
  func.func @_awl_kernel(%arg0: memref<2x2xf32, #tpu.memory_space<vmem>>, %arg1: memref<1x1xf32, #tpu.memory_space<smem>>) attributes {dimension_semantics = [], scalar_prefetch = 0 : i64, scratch_operands = 0 : i64, tpu.core_type = #tpu.core_type<tc>} {
    %c0 = arith.constant 0 : index
    %c0_0 = arith.constant 0 : index
    %0 = vector.load %arg0[%c0, %c0_0] : memref<2x2xf32, #tpu.memory_space<vmem>>, vector<2x2xf32>
    %1 = vector.extract_strided_slice %0 {offsets = [0, 0], sizes = [1, 2], strides = [1, 1]} : vector<2x2xf32> to vector<1x2xf32>
    %2 = vector.extract_strided_slice %0 {offsets = [1, 0], sizes = [1, 2], strides = [1, 1]} : vector<2x2xf32> to vector<1x2xf32>
    %3 = arith.mulf %1, %1 : vector<1x2xf32>
    %cst = arith.constant 5.000000e-01 : f32
    %4 = vector.broadcast %cst : f32 to vector<1x2xf32>
    %5 = arith.divf %4, %3 : vector<1x2xf32>
    %6 = arith.mulf %5, %2 : vector<1x2xf32>
    %cst_1 = arith.constant 1.000000e+00 : f32
    %7 = vector.broadcast %cst_1 : f32 to vector<1x2xf32>
    %8 = arith.addf %7, %3 : vector<1x2xf32>
    %9 = math.log %8 : vector<1x2xf32>
    %10 = arith.addf %6, %9 : vector<1x2xf32>
    %11 = vector.shape_cast %10 : vector<1x2xf32> to vector<1x1x2xf32>
    %cst_2 = arith.constant dense<0.000000e+00> : vector<1xf32>
    %12 = vector.multi_reduction <add>, %11, %cst_2 [1, 2] : vector<1x1x2xf32> to vector<1xf32>
    %13 = vector.shape_cast %12 : vector<1xf32> to vector<1x1x1xf32>
    %14 = vector.extract %13[0, 0, 0] : f32 from vector<1x1x1xf32>
    %c0_3 = arith.constant 0 : index
    %c0_4 = arith.constant 0 : index
    %15 = memref.load %arg1[%c0_3, %c0_4] : memref<1x1xf32, #tpu.memory_space<smem>>
    memref.store %14, %arg1[%c0_3, %c0_4] : memref<1x1xf32, #tpu.memory_space<smem>>
    return
  }
}

</mosaic_0001>

<llo_original>
// kernel: tpu_custom_call.1
$region0: #{tpu_custom_call.1}
  #allocation0 [shape = 'u32[]', space=smem, size = 0x4, offset = 0x4, fixed_abs, tag = 'smem constant byte address 0x4 - core index']
  #allocation1 [shape = 'u32[144,128]{1,0:T(1,128)}', space=vmem, size = 0x12000, scoped, tag = 'internal scratch']
  %s0 = inlined_call_operand.hbm [shape: f32[2,2], index: 0, kind: input, shape index: {}]
  %s1 = inlined_call_operand.hbm [shape: f32[1,1], index: 1, kind: output, shape index: {}]
  %s2 = sld [smem:[#allocation0]]
  $region18: #{tpu_custom_call.1} parent=0
    _
  %s4 = ssub.s32 1, %s2
  %s5 = scalar_select 0, %s4, %s2
  $region1: #{tpu_custom_call.1} parent=0
    #allocation2 [shape = 'u8[1024]{0}', space=vmem, size = 0x400, scoped, tag = 'input window, operand 0, single buffered']
    #allocation3 [shape = 's32[1]{0}', space=sflag, size = 0x4, scoped, tag = 'scoped memory for tpu_custom_call.1']
    #allocation4 [shape = 's32[1]{0}', space=sflag, size = 0x4, scoped, tag = 'scoped memory for tpu_custom_call.1']
    #allocation5 [shape = 'u8[512]{0}', space=smem, size = 0x200, scoped, tag = 'output window, operand 0, single buffered']
    %6 = vsyncpa [#allocation3], 0
    %7 = vsyncpa [#allocation4], 0
    // Predicated region
    $region2: #{tpu_custom_call.1} parent=1 // pred_check
      _
    $region3: #{tpu_custom_call.1} parent=1 // pred_check_branch
      %9 = sbr.rel (0) target = $region5
    $region4: #{tpu_custom_call.1} parent=1 // pred_region
      %s11 = ssub.s32 32, 32
      %12 = vsyncadd [#allocation3], %s11
      %s14 = sshll.u32 [#allocation2], 4
      %s15 = int_to_ptr.vmem [resolvable:$true] %s14
      %17 = dma.hbm_to_vmem [thread:$0]  %s0, 32, %s15, [#allocation3]
    $region5: #{tpu_custom_call.1} parent=1 // pred_fallthru
      _
    // Predicated region
    $region6: #{tpu_custom_call.1} parent=1 // pred_check
      _
    $region7: #{tpu_custom_call.1} parent=1 // pred_check_branch
      %19 = sbr.rel (0) target = $region9
    $region8: #{tpu_custom_call.1} parent=1 // pred_region
      %20 = dma.done [#allocation3], 32
    $region9: #{tpu_custom_call.1} parent=1 // pred_fallthru
      _
    %v21 = vld [vmem:[#allocation2] sm:$0x3]
    %v22 = vmul.f32 %v21, %v21
    %v23 = vrcp.pop %v22
    %v24 = vmul.f32 0.5, %v23
    %v26 = vrot.slane %v21, 1
    %v28 = vmul.f32 %v24, %v26
    %v29 = vadd.f32 %v22, 1.0
    %v30 = vlog2.pop %v29
    %v31 = vmul.f32 %v30, 0.6931472
    %v32 = vadd.f32 %v28, %v31
    %vm33 = vcmask 8192
    %v34 = vsel %vm33, %v32, 0.0
    %35 = vadd.xlane.f32.xlu0 %v34
    %v36 = vpop.xlane.xlu0 %35
    %v37 = vrot.slane %v36, 4
    %v38 = vadd.f32 %v36, %v37
    %v39 = vrot.slane %v38, 2
    %v40 = vadd.f32 %v38, %v39
    %v41 = vrot.slane %v40, 1
    %v42 = vadd.f32 %v40, %v41
    %s43 = vtos %v42
    %s44 = scalar_lea.smem [#allocation5], 0
    %45 = sst [smem:[%s44]] %s43
    // Predicated region
    $region10: #{tpu_custom_call.1} parent=1 // pred_check
      _
    $region11: #{tpu_custom_call.1} parent=1 // pred_check_branch
      %47 = sbr.rel (0) target = $region13
    $region12: #{tpu_custom_call.1} parent=1 // pred_region
      %s49 = ssub.s32 16, 16
      %50 = vsyncadd [#allocation4], %s49
      %53 = dma.smem_to_hbm [#allocation5], 16, %s1, [#allocation4]
    $region13: #{tpu_custom_call.1} parent=1 // pred_fallthru
      _
    // Predicated region
    $region14: #{tpu_custom_call.1} parent=1 // pred_check
      _
    $region15: #{tpu_custom_call.1} parent=1 // pred_check_branch
      %55 = sbr.rel (0) target = $region17
    $region16: #{tpu_custom_call.1} parent=1 // pred_region
      %56 = dma.done [#allocation4], 16
    $region17: #{tpu_custom_call.1} parent=1 // pred_fallthru
      _
    %57 = sfence
    %58 = vsyncpa [#allocation3], 1
    %59 = vsyncpa [#allocation4], 1

</llo_original>
